<compile_context>
chip_gen: v6e
topology: v6e:2x2x1
jax: 0.10.0
libtpu: 0.0.40
codegen_flags: <defaults>
</compile_context>

<pallas_src>
import functools
import math

import jax
import jax.numpy as jnp
from jax import lax
from jax.experimental import pallas as pl
from jax.experimental.pallas import tpu as pltpu


def _round_up(x, m):
    return ((x + m - 1) // m) * m


def _derive_vmem_limit(bm, bn, d_pad, itemsize):
    """Scoped-VMEM budget derived from tile shapes (portable across v5e/v6e/v7x)."""
    f32 = 4
    lane_pad = lambda rows: rows * 128 * f32      # (rows, 1) block pads to 128 lanes
    dbuf = 2                                      # default double buffering
    in_bytes = dbuf * (bm * d_pad * itemsize      # anchor feature block
                       + d_pad * bn * itemsize    # pre-transposed contrast block
                       + lane_pad(bm)             # anchor group ids
                       + 8 * bn * 4               # contrast group ids
                       + lane_pad(bm))            # per-row positive counts
    out_bytes = dbuf * lane_pad(bm)               # per-row loss block
    scratch = bm * d_pad * itemsize + 3 * lane_pad(bm)
    work = 6 * bm * bn * f32                      # s_tile / exp / mask temporaries
    return max(in_bytes + out_bytes + scratch + work + (8 << 20), 32 << 20)


def _supcon_kernel(gid_row_ref, gid_col_ref, pos_cnt_ref, feat_row_ref,
                   feat_colT_ref, loss_ref, fs_sc, m_sc, l_sc, s_sc, *,
                   inv_temp, loss_scale, n_valid, mask_cols, block_m, block_n,
                   exp_dtype, static_max):
    i = pl.program_id(0)
    j = pl.program_id(1)

    @pl.when(j == 0)
    def _init():
        if static_max is None:
            # Large finite negative (not -inf): guards exp(-inf - -inf) = NaN on
            # degenerate tiles with no valid column.
            m_sc[...] = jnp.full((block_m, 1), -1e30, jnp.float32)
        l_sc[...] = jnp.zeros((block_m, 1), jnp.float32)
        s_sc[...] = jnp.zeros((block_m, 1), jnp.float32)
        # Fold 1/temperature into the anchor rows once per row block
        # (N*D multiplies total instead of an N^2 scale of the logits).
        fs_sc[...] = (feat_row_ref[...].astype(jnp.float32)
                      * inv_temp).astype(fs_sc.dtype)

    # Temperature-scaled logits tile (bm, bn), f32 accumulation on the MXU.
    # Contrast tile arrives pre-transposed as (d_pad, bn): natural (M,K)x(K,N).
    s_tile = jnp.dot(fs_sc[...], feat_colT_ref[...],
                     preferred_element_type=jnp.float32)

    # Validity: exclude self-contrast diagonal and (if any) padded columns.
    row_ids = i * block_m + lax.broadcasted_iota(jnp.int32, (block_m, 1), 0)
    col_ids = j * block_n + lax.broadcasted_iota(jnp.int32, (1, block_n), 1)
    valid = row_ids != col_ids
    if mask_cols:
        valid = jnp.logical_and(valid, col_ids < n_valid)

    # Positive-pair mask rebuilt in-kernel from group ids (never materialized
    # as an [N, N] float array anywhere).
    pos = jnp.logical_and(gid_row_ref[...] == gid_col_ref[...], valid)

    if static_max is None:
        # Online (streaming) log-sum-exp over the contrast axis.
        tile_max = jnp.max(jnp.where(valid, s_tile, -jnp.inf),
                           axis=1, keepdims=True)
        m_prev = m_sc[...]
        m_new = jnp.maximum(m_prev, tile_max)
        alpha = jnp.exp(m_prev - m_new)
        m_sc[...] = m_new
        shifted = s_tile - m_new
    else:
        # Features known L2-normalized: logits <= 1/temperature, so a static
        # shift is numerically safe and the tile becomes single-pass.
        shifted = s_tile - static_max

    # exp in exp_dtype (bf16 EUP path on v6e/v7x when enabled), f32 row sums.
    # TODO(synk): v5e has no bf16 EUP; callers on v5e should pass exp_in_bf16=False.
    e = jnp.exp(shifted.astype(exp_dtype))
    e = jnp.where(valid, e, jnp.zeros((), exp_dtype)).astype(jnp.float32)
    e_sum = jnp.sum(e, axis=1, keepdims=True)
    if static_max is None:
        l_sc[...] = alpha * l_sc[...] + e_sum
    else:
        l_sc[...] = l_sc[...] + e_sum

    # Positive-pair logit sum (positive count is precomputed in the wrapper).
    s_sc[...] = s_sc[...] + jnp.sum(jnp.where(pos, s_tile, 0.0),
                                    axis=1, keepdims=True)

    @pl.when(j == pl.num_programs(1) - 1)
    def _finalize():
        p = pos_cnt_ref[...]
        if static_max is None:
            lse = m_sc[...] + jnp.log(l_sc[...])
        else:
            lse = static_max + jnp.log(l_sc[...])
        mean_log_prob_pos = s_sc[...] / jnp.maximum(p, 1.0) - lse
        # Rows with no positives write 0 (torch reference would NaN); padded
        # rows are dropped from the mean in the wrapper.
        loss_ref[...] = jnp.where(p > 0.0, loss_scale * mean_log_prob_pos, 0.0)


def supcon_loss(features, labels=None, mask=None, *, temperature=0.07,
                contrast_mode='all', base_temperature=0.07,
                block_m=512, block_n=512, compute_dtype=jnp.bfloat16,
                features_normalized=False, exp_in_bf16=None):
    """JAX/Pallas port of SupConLoss.forward (contrast_mode='all').

    features: [bsz, n_views, ...] (extra dims flattened to the feature dim)
    labels:   optional [bsz] int labels
    mask:     optional [bsz, bsz] float mask (falls back to pure JAX)
    features_normalized: set True when features are L2-normalized to enable the
        static-shift single-pass LSE fast path.
    """
    if features.ndim < 3:
        raise ValueError('`features` needs to be [bsz, n_views, ...]')
    if features.ndim > 3:
        features = features.reshape(features.shape[0], features.shape[1], -1)
    bsz, n_views, dim = features.shape

    if labels is not None and mask is not None:
        raise ValueError('Cannot define both `labels` and `mask`')
    if contrast_mode != 'all':
        # TODO(synk): contrast_mode='one' (single anchor view) not implemented.
        raise ValueError('Only contrast_mode="all" is supported')

    if mask is not None:
        # TODO(synk): arbitrary (possibly asymmetric) pairwise masks cannot be
        # expressed as group ids; this rare path falls back to pure JAX.
        return _supcon_loss_ref(features, labels=None, mask=mask,
                                temperature=temperature,
                                base_temperature=base_temperature)

    if labels is None:
        gid_small = jnp.arange(bsz, dtype=jnp.int32)       # SimCLR: eye mask
        pos_small = jnp.full((bsz,), float(n_views - 1), jnp.float32)
    else:
        labels = jnp.asarray(labels).reshape(-1)
        if labels.shape[0] != bsz:
            raise ValueError('Num of labels does not match num of features')
        gid_small = labels.astype(jnp.int32)
        # Per-row positive count hoisted out of the kernel:
        # p[r] = n_views * |{j : label[j] == label[r]}| - 1 (self excluded).
        same = (gid_small[:, None] == gid_small[None, :])
        pos_small = (n_views * jnp.sum(same, axis=1).astype(jnp.float32)) - 1.0

    n = n_views * bsz
    # Pad the feature dim to full MXU K-tiles (256 on v6e/v7x when dim > 128).
    d_pad = 128 if dim <= 128 else _round_up(dim, 256)

    bm = min(block_m, _round_up(n, 8))
    bn = min(block_n, _round_up(n, 128))
    lcm = (bm * bn) // math.gcd(bm, bn)
    n_pad = _round_up(n, lcm)
    # Keep >= 2 row blocks so the "parallel" axis can shard across both
    # TensorCores on v7x-class chips (near-neutral on v5e/v6e).
    while n_pad // bm < 2 and bm % 16 == 0 and bm > 8:
        bm //= 2

    if exp_in_bf16 is None:
        exp_in_bf16 = (jnp.dtype(compute_dtype) == jnp.dtype(jnp.bfloat16)
                       and d_pad <= 512)
    exp_dtype = jnp.bfloat16 if exp_in_bf16 else jnp.float32
    static_max = float(1.0 / temperature) if features_normalized else None

    # torch.cat(torch.unbind(features, dim=1), dim=0) -> view-major stacking.
    # Cast to compute_dtype BEFORE the transpose/pad copies (halves their HBM
    # traffic; this is the array the kernel re-reads n_pad/bm times).
    cf = jnp.transpose(features.astype(compute_dtype), (1, 0, 2)).reshape(n, dim)
    cf = jnp.pad(cf, ((0, n_pad - n), (0, d_pad - dim)))
    cf_t = jnp.transpose(cf)                               # (d_pad, n_pad) contrast

    gid = jnp.tile(gid_small, n_views)                     # gid[r] = gid_small[r % bsz]
    gid = jnp.pad(gid, (0, n_pad - n), constant_values=-1)
    gid_row = gid.reshape(n_pad, 1)
    gid_col = gid.reshape(1, n_pad)

    pos_cnt = jnp.tile(pos_small, n_views)
    pos_cnt = jnp.pad(pos_cnt, (0, n_pad - n)).reshape(n_pad, 1)

    grid = (n_pad // bm, n_pad // bn)
    itemsize = jnp.dtype(compute_dtype).itemsize

    kernel = functools.partial(
        _supcon_kernel,
        inv_temp=float(1.0 / temperature),
        loss_scale=float(-(temperature / base_temperature)),
        n_valid=n,
        mask_cols=(n_pad != n),
        block_m=bm, block_n=bn,
        exp_dtype=exp_dtype,
        static_max=static_max)

    cost = pl.CostEstimate(
        flops=2 * n_pad * n_pad * d_pad,
        transcendentals=n_pad * n_pad,
        bytes_accessed=(grid[0] + 1) * n_pad * d_pad * itemsize + 4 * n_pad * 4)

    # TODO(synk): for very large D, add a K-tiled innermost grid axis (or
    # pl.Buffered(3) on the contrast spec) so per-step DMA is (d_tile, bn).
    per_row_loss = pl.pallas_call(
        kernel,
        out_shape=jax.ShapeDtypeStruct((n_pad, 1), jnp.float32),
        grid=grid,
        in_specs=[
            pl.BlockSpec((bm, 1), lambda i, j: (i, 0)),       # anchor group ids
            pl.BlockSpec((1, bn), lambda i, j: (0, j)),       # contrast group ids
            pl.BlockSpec((bm, 1), lambda i, j: (i, 0)),       # per-row positive counts
            pl.BlockSpec((bm, d_pad), lambda i, j: (i, 0)),   # anchor features
            pl.BlockSpec((d_pad, bn), lambda i, j: (0, j)),   # contrast features (pre-T)
        ],
        out_specs=pl.BlockSpec((bm, 1), lambda i, j: (i, 0)),
        scratch_shapes=[
            pltpu.VMEM((bm, d_pad), compute_dtype),   # temperature-scaled anchors
            pltpu.VMEM((bm, 1), jnp.float32),         # running max
            pltpu.VMEM((bm, 1), jnp.float32),         # running sum(exp)
            pltpu.VMEM((bm, 1), jnp.float32),         # sum(mask * logits)
        ],
        compiler_params=pltpu.CompilerParams(
            dimension_semantics=("parallel", "arbitrary"),
            vmem_limit_bytes=_derive_vmem_limit(bm, bn, d_pad, itemsize)),
        cost_estimate=cost,
    )(gid_row, gid_col, pos_cnt, cf, cf_t)

    # Mean over the real (non-padded) anchor rows == loss.view(...).mean().
    return jnp.mean(per_row_loss[:n, 0])


def _supcon_loss_ref(features, labels=None, mask=None, temperature=0.07,
                     base_temperature=0.07):
    """Pure-JAX reference mirroring the PyTorch module (contrast_mode='all')."""
    if features.ndim > 3:
        features = features.reshape(features.shape[0], features.shape[1], -1)
    bsz, n_views, dim = features.shape
    if labels is None and mask is None:
        mask = jnp.eye(bsz, dtype=jnp.float32)
    elif labels is not None:
        labels = jnp.asarray(labels).reshape(-1, 1)
        mask = jnp.equal(labels, labels.T).astype(jnp.float32)
    else:
        mask = mask.astype(jnp.float32)
    cf = jnp.transpose(features, (1, 0, 2)).reshape(n_views * bsz, dim)
    cf = cf.astype(jnp.float32)
    logits = jnp.dot(cf, cf.T) / temperature
    logits = logits - jnp.max(logits, axis=1, keepdims=True)
    n = n_views * bsz
    logits_mask = 1.0 - jnp.eye(n, dtype=jnp.float32)
    mask = jnp.tile(mask, (n_views, n_views)) * logits_mask
    exp_logits = jnp.exp(logits) * logits_mask
    log_prob = logits - jnp.log(exp_logits.sum(1, keepdims=True))
    mean_log_prob_pos = (mask * log_prob).sum(1) / mask.sum(1)
    loss = -(temperature / base_temperature) * mean_log_prob_pos
    return loss.mean()


if __name__ == "__main__":
    key = jax.random.PRNGKey(0)
    k1, k2 = jax.random.split(key)

    bsz, n_views, dim = 8, 2, 32
    feats = jax.random.normal(k1, (bsz, n_views, dim), dtype=jnp.float32)
    # L2-normalize features along the last dim (standard SupCon usage).
    feats = feats / jnp.linalg.norm(feats, axis=-1, keepdims=True)
    labels = jax.random.randint(k2, (bsz,), 0, 3)

    ref_sup = _supcon_loss_ref(feats, labels=labels)
    ref_unsup = _supcon_loss_ref(feats)

    # f32 MXU path.
    loss_sup_f32 = supcon_loss(feats, labels=labels, compute_dtype=jnp.float32)
    loss_unsup_f32 = supcon_loss(feats, compute_dtype=jnp.float32)
    # Static-shift single-pass LSE path (valid: feats are L2-normalized).
    loss_sup_norm = supcon_loss(feats, labels=labels, compute_dtype=jnp.float32,
                                features_normalized=True)
    # Default bf16 MXU + bf16 EUP-exp path.
    loss_sup_bf16 = supcon_loss(feats, labels=labels)
    loss_unsup_bf16 = supcon_loss(feats)

    jax.block_until_ready((loss_sup_f32, loss_unsup_f32, loss_sup_norm,
                           loss_sup_bf16, loss_unsup_bf16))

    # f32 paths: TPU f32 matmuls use MXU bf16 passes at default precision, so
    # allow a modest tolerance; any semantic bug would be far outside it.
    assert jnp.allclose(loss_sup_f32, ref_sup, rtol=3e-2, atol=3e-2), \
        (loss_sup_f32, ref_sup)
    assert jnp.allclose(loss_unsup_f32, ref_unsup, rtol=3e-2, atol=3e-2), \
        (loss_unsup_f32, ref_unsup)
    assert jnp.allclose(loss_sup_norm, ref_sup, rtol=3e-2, atol=3e-2), \
        (loss_sup_norm, ref_sup)

    # bf16 paths: looser tolerance (bf16 rounding of features and exps).
    assert jnp.allclose(loss_sup_bf16, ref_sup, rtol=5e-2, atol=1e-1), \
        (loss_sup_bf16, ref_sup)
    assert jnp.allclose(loss_unsup_bf16, ref_unsup, rtol=5e-2, atol=1e-1), \
        (loss_unsup_bf16, ref_unsup)

    print("KERNEL_OK")
</pallas_src>

<mosaic_0001>
module attributes {stable_mosaic.version = 11 : i64} {
  func.func @_supcon_kernel(%arg0: i32, %arg1: i32, %arg2: memref<16x1xi32, #tpu.memory_space<vmem>>, %arg3: memref<1x128xi32, #tpu.memory_space<vmem>>, %arg4: memref<16x1xf32, #tpu.memory_space<vmem>>, %arg5: memref<16x128xf32, #tpu.memory_space<vmem>>, %arg6: memref<128x128xf32, #tpu.memory_space<vmem>>, %arg7: memref<16x1xf32, #tpu.memory_space<vmem>>, %arg8: memref<16x128xf32, #tpu.memory_space<vmem>>, %arg9: memref<16x1xf32, #tpu.memory_space<vmem>>, %arg10: memref<16x1xf32, #tpu.memory_space<vmem>>, %arg11: memref<16x1xf32, #tpu.memory_space<vmem>>) attributes {dimension_semantics = [#tpu.dimension_semantics<parallel>, #tpu.dimension_semantics<arbitrary>], iteration_bounds = array<i64: 8, 1>, scalar_prefetch = 0 : i64, scratch_operands = 4 : i64, tpu.core_type = #tpu.core_type<tc>, window_params = [{transform_indices = @transform_0, window_bounds = array<i64: 16, 1>}, {transform_indices = @transform_1, window_bounds = array<i64: 1, 128>}, {transform_indices = @transform_2, window_bounds = array<i64: 16, 1>}, {transform_indices = @transform_3, window_bounds = array<i64: 16, 128>}, {transform_indices = @transform_4, window_bounds = array<i64: 128, 128>}, {transform_indices = @transform_5, window_bounds = array<i64: 16, 1>}]} {
    %c0_i32 = arith.constant 0 : i32
    %0 = arith.cmpi eq, %arg1, %c0_i32 : i32
    %1 = arith.extui %0 : i1 to i32
    %c0_i32_0 = arith.constant 0 : i32
    %2 = arith.cmpi ne, %1, %c0_i32_0 : i32
    scf.if %2 {
      %cst_29 = arith.constant -1.000000e+30 : f32
      %57 = vector.broadcast %cst_29 : f32 to vector<16x1xf32>
      %c0_30 = arith.constant 0 : index
      %c0_31 = arith.constant 0 : index
      %58 = vector.load %arg9[%c0_30, %c0_31] : memref<16x1xf32, #tpu.memory_space<vmem>>, vector<16x1xf32>
      tpu.vector_store %arg9[%c0_30, %c0_31], %57 {strides = array<i32>} : memref<16x1xf32, #tpu.memory_space<vmem>>, vector<16x1xf32>,
      %cst_32 = arith.constant 0.000000e+00 : f32
      %59 = vector.broadcast %cst_32 : f32 to vector<16x1xf32>
      %c0_33 = arith.constant 0 : index
      %c0_34 = arith.constant 0 : index
      %60 = vector.load %arg10[%c0_33, %c0_34] : memref<16x1xf32, #tpu.memory_space<vmem>>, vector<16x1xf32>
      tpu.vector_store %arg10[%c0_33, %c0_34], %59 {strides = array<i32>} : memref<16x1xf32, #tpu.memory_space<vmem>>, vector<16x1xf32>,
      %cst_35 = arith.constant 0.000000e+00 : f32
      %61 = vector.broadcast %cst_35 : f32 to vector<16x1xf32>
      %c0_36 = arith.constant 0 : index
      %c0_37 = arith.constant 0 : index
      %62 = vector.load %arg11[%c0_36, %c0_37] : memref<16x1xf32, #tpu.memory_space<vmem>>, vector<16x1xf32>
      tpu.vector_store %arg11[%c0_36, %c0_37], %61 {strides = array<i32>} : memref<16x1xf32, #tpu.memory_space<vmem>>, vector<16x1xf32>,
      %c0_38 = arith.constant 0 : index
      %c0_39 = arith.constant 0 : index
      %63 = vector.load %arg5[%c0_38, %c0_39] : memref<16x128xf32, #tpu.memory_space<vmem>>, vector<16x128xf32>
      %cst_40 = arith.constant 14.2857141 : f32
      %64 = vector.broadcast %cst_40 : f32 to vector<16x128xf32>
      %65 = arith.mulf %63, %64 : vector<16x128xf32>
      %c0_41 = arith.constant 0 : index
      %c0_42 = arith.constant 0 : index
      %66 = vector.load %arg8[%c0_41, %c0_42] : memref<16x128xf32, #tpu.memory_space<vmem>>, vector<16x128xf32>
      tpu.vector_store %arg8[%c0_41, %c0_42], %65 {strides = array<i32>} : memref<16x128xf32, #tpu.memory_space<vmem>>, vector<16x128xf32>,
    } else {
    }
    %c0 = arith.constant 0 : index
    %c0_1 = arith.constant 0 : index
    %3 = vector.load %arg8[%c0, %c0_1] : memref<16x128xf32, #tpu.memory_space<vmem>>, vector<16x128xf32>
    %c0_2 = arith.constant 0 : index
    %c0_3 = arith.constant 0 : index
    %4 = vector.load %arg6[%c0_2, %c0_3] : memref<128x128xf32, #tpu.memory_space<vmem>>, vector<128x128xf32>
    %cst = arith.constant dense<0.000000e+00> : vector<16x128xf32>
    %5 = tpu.matmul %3, %4, %cst {dimension_numbers = #tpu.dot_dimension_numbers<[1], [0], [0], [1], [0, 0, 1, 1], [], []>} : vector<16x128xf32>, vector<128x128xf32>, vector<16x128xf32> -> vector<16x128xf32>
    %c16_i32 = arith.constant 16 : i32
    %6 = arith.muli %arg0, %c16_i32 : i32
    %7 = tpu.iota {dimensions = array<i32: 0>} : vector<16x1xi32>
    %8 = vector.broadcast %6 : i32 to vector<16x1xi32>
    %9 = arith.addi %8, %7 : vector<16x1xi32>
    %c128_i32 = arith.constant 128 : i32
    %10 = arith.muli %arg1, %c128_i32 : i32
    %11 = tpu.iota {dimensions = array<i32: 1>} : vector<1x128xi32>
    %12 = vector.broadcast %10 : i32 to vector<1x128xi32>
    %13 = arith.addi %12, %11 : vector<1x128xi32>
    %14 = vector.broadcast %9 : vector<16x1xi32> to vector<16x128xi32>
    %15 = vector.broadcast %13 : vector<1x128xi32> to vector<16x128xi32>
    %16 = arith.cmpi ne, %14, %15 : vector<16x128xi32>
    %c16_i32_4 = arith.constant 16 : i32
    %17 = vector.broadcast %c16_i32_4 : i32 to vector<1x128xi32>
    %18 = arith.cmpi slt, %13, %17 : vector<1x128xi32>
    %19 = vector.broadcast %18 : vector<1x128xi1> to vector<16x128xi1>
    %20 = arith.andi %16, %19 : vector<16x128xi1>
    %c0_5 = arith.constant 0 : index
    %c0_6 = arith.constant 0 : index
    %21 = vector.load %arg2[%c0_5, %c0_6] : memref<16x1xi32, #tpu.memory_space<vmem>>, vector<16x1xi32>
    %c0_7 = arith.constant 0 : index
    %c0_8 = arith.constant 0 : index
    %22 = vector.load %arg3[%c0_7, %c0_8] : memref<1x128xi32, #tpu.memory_space<vmem>>, vector<1x128xi32>
    %23 = vector.broadcast %21 : vector<16x1xi32> to vector<16x128xi32>
    %24 = vector.broadcast %22 : vector<1x128xi32> to vector<16x128xi32>
    %25 = arith.cmpi eq, %23, %24 : vector<16x128xi32>
    %26 = arith.andi %25, %20 : vector<16x128xi1>
    %cst_9 = arith.constant 0xFF800000 : f32
    %27 = vector.broadcast %cst_9 : f32 to vector<16x128xf32>
    %28 = arith.select %20, %5, %27 : vector<16x128xi1>, vector<16x128xf32>
    %cst_10 = arith.constant dense<0xFF800000> : vector<16xf32>
    %29 = vector.multi_reduction <maximumf>, %28, %cst_10 [1] : vector<16x128xf32> to vector<16xf32>
    %30 = vector.shape_cast %29 : vector<16xf32> to vector<16x1xf32>
    %c0_11 = arith.constant 0 : index
    %c0_12 = arith.constant 0 : index
    %31 = vector.load %arg9[%c0_11, %c0_12] : memref<16x1xf32, #tpu.memory_space<vmem>>, vector<16x1xf32>
    %32 = arith.maximumf %31, %30 : vector<16x1xf32>
    %33 = arith.subf %31, %32 : vector<16x1xf32>
    %34 = math.exp %33 : vector<16x1xf32>
    %c0_13 = arith.constant 0 : index
    %c0_14 = arith.constant 0 : index
    %35 = vector.load %arg9[%c0_13, %c0_14] : memref<16x1xf32, #tpu.memory_space<vmem>>, vector<16x1xf32>
    tpu.vector_store %arg9[%c0_13, %c0_14], %32 {strides = array<i32>} : memref<16x1xf32, #tpu.memory_space<vmem>>, vector<16x1xf32>,
    %36 = vector.broadcast %32 : vector<16x1xf32> to vector<16x128xf32>
    %37 = arith.subf %5, %36 : vector<16x128xf32>
    %38 = math.exp %37 : vector<16x128xf32>
    %cst_15 = arith.constant 0.000000e+00 : f32
    %39 = vector.broadcast %cst_15 : f32 to vector<16x128xf32>
    %40 = arith.select %20, %38, %39 : vector<16x128xi1>, vector<16x128xf32>
    %cst_16 = arith.constant dense<0.000000e+00> : vector<16xf32>
    %41 = vector.multi_reduction <add>, %40, %cst_16 [1] : vector<16x128xf32> to vector<16xf32>
    %42 = vector.shape_cast %41 : vector<16xf32> to vector<16x1xf32>
    %c0_17 = arith.constant 0 : index
    %c0_18 = arith.constant 0 : index
    %43 = vector.load %arg10[%c0_17, %c0_18] : memref<16x1xf32, #tpu.memory_space<vmem>>, vector<16x1xf32>
    %44 = arith.mulf %34, %43 : vector<16x1xf32>
    %45 = arith.addf %44, %42 : vector<16x1xf32>
    %c0_19 = arith.constant 0 : index
    %c0_20 = arith.constant 0 : index
    %46 = vector.load %arg10[%c0_19, %c0_20] : memref<16x1xf32, #tpu.memory_space<vmem>>, vector<16x1xf32>
    tpu.vector_store %arg10[%c0_19, %c0_20], %45 {strides = array<i32>} : memref<16x1xf32, #tpu.memory_space<vmem>>, vector<16x1xf32>,
    %c0_21 = arith.constant 0 : index
    %c0_22 = arith.constant 0 : index
    %47 = vector.load %arg11[%c0_21, %c0_22] : memref<16x1xf32, #tpu.memory_space<vmem>>, vector<16x1xf32>
    %cst_23 = arith.constant 0.000000e+00 : f32
    %48 = vector.broadcast %cst_23 : f32 to vector<16x128xf32>
    %49 = arith.select %26, %5, %48 : vector<16x128xi1>, vector<16x128xf32>
    %cst_24 = arith.constant dense<0.000000e+00> : vector<16xf32>
    %50 = vector.multi_reduction <add>, %49, %cst_24 [1] : vector<16x128xf32> to vector<16xf32>
    %51 = vector.shape_cast %50 : vector<16xf32> to vector<16x1xf32>
    %52 = arith.addf %47, %51 : vector<16x1xf32>
    %c0_25 = arith.constant 0 : index
    %c0_26 = arith.constant 0 : index
    %53 = vector.load %arg11[%c0_25, %c0_26] : memref<16x1xf32, #tpu.memory_space<vmem>>, vector<16x1xf32>
    tpu.vector_store %arg11[%c0_25, %c0_26], %52 {strides = array<i32>} : memref<16x1xf32, #tpu.memory_space<vmem>>, vector<16x1xf32>,
    %c0_i32_27 = arith.constant 0 : i32
    %54 = arith.cmpi eq, %arg1, %c0_i32_27 : i32
    %55 = arith.extui %54 : i1 to i32
    %c0_i32_28 = arith.constant 0 : i32
    %56 = arith.cmpi ne, %55, %c0_i32_28 : i32
    scf.if %56 {
      %c0_29 = arith.constant 0 : index
      %c0_30 = arith.constant 0 : index
      %57 = vector.load %arg4[%c0_29, %c0_30] : memref<16x1xf32, #tpu.memory_space<vmem>>, vector<16x1xf32>
      %c0_31 = arith.constant 0 : index
      %c0_32 = arith.constant 0 : index
      %58 = vector.load %arg9[%c0_31, %c0_32] : memref<16x1xf32, #tpu.memory_space<vmem>>, vector<16x1xf32>
      %c0_33 = arith.constant 0 : index
      %c0_34 = arith.constant 0 : index
      %59 = vector.load %arg10[%c0_33, %c0_34] : memref<16x1xf32, #tpu.memory_space<vmem>>, vector<16x1xf32>
      %60 = math.log %59 : vector<16x1xf32>
      %61 = arith.addf %58, %60 : vector<16x1xf32>
      %c0_35 = arith.constant 0 : index
      %c0_36 = arith.constant 0 : index
      %62 = vector.load %arg11[%c0_35, %c0_36] : memref<16x1xf32, #tpu.memory_space<vmem>>, vector<16x1xf32>
      %cst_37 = arith.constant 1.000000e+00 : f32
      %63 = vector.broadcast %cst_37 : f32 to vector<16x1xf32>
      %64 = arith.maximumf %57, %63 : vector<16x1xf32>
      %65 = arith.divf %62, %64 : vector<16x1xf32>
      %66 = arith.subf %65, %61 : vector<16x1xf32>
      %cst_38 = arith.constant 0.000000e+00 : f32
      %67 = vector.broadcast %cst_38 : f32 to vector<16x1xf32>
      %68 = arith.cmpf ogt, %57, %67 : vector<16x1xf32>
      %cst_39 = arith.constant -1.000000e+00 : f32
      %69 = vector.broadcast %cst_39 : f32 to vector<16x1xf32>
      %70 = arith.mulf %69, %66 : vector<16x1xf32>
      %cst_40 = arith.constant 0.000000e+00 : f32
      %71 = vector.broadcast %cst_40 : f32 to vector<16x1xf32>
      %72 = arith.select %68, %70, %71 : vector<16x1xi1>, vector<16x1xf32>
      %c0_41 = arith.constant 0 : index
      %c0_42 = arith.constant 0 : index
      %73 = vector.load %arg7[%c0_41, %c0_42] : memref<16x1xf32, #tpu.memory_space<vmem>>, vector<16x1xf32>
      tpu.vector_store %arg7[%c0_41, %c0_42], %72 {strides = array<i32>} : memref<16x1xf32, #tpu.memory_space<vmem>>, vector<16x1xf32>,
    } else {
    }
    return
  }
  func.func @transform_0(%arg0: i32, %arg1: i32) -> (i32, i32) {
    %c0_i32 = arith.constant 0 : i32
    %c0_i32_0 = arith.constant 0 : i32
    return %arg0, %c0_i32 : i32, i32
  }
  func.func @transform_1(%arg0: i32, %arg1: i32) -> (i32, i32) {
    %c0_i32 = arith.constant 0 : i32
    %c0_i32_0 = arith.constant 0 : i32
    return %c0_i32, %arg1 : i32, i32
  }
  func.func @transform_2(%arg0: i32, %arg1: i32) -> (i32, i32) {
    %c0_i32 = arith.constant 0 : i32
    %c0_i32_0 = arith.constant 0 : i32
    return %arg0, %c0_i32 : i32, i32
  }
  func.func @transform_3(%arg0: i32, %arg1: i32) -> (i32, i32) {
    %c0_i32 = arith.constant 0 : i32
    %c0_i32_0 = arith.constant 0 : i32
    return %arg0, %c0_i32 : i32, i32
  }
  func.func @transform_4(%arg0: i32, %arg1: i32) -> (i32, i32) {
    %c0_i32 = arith.constant 0 : i32
    %c0_i32_0 = arith.constant 0 : i32
    return %c0_i32, %arg1 : i32, i32
  }
  func.func @transform_5(%arg0: i32, %arg1: i32) -> (i32, i32) {
    %c0_i32 = arith.constant 0 : i32
    %c0_i32_0 = arith.constant 0 : i32
    return %arg0, %c0_i32 : i32, i32
  }
}

</mosaic_0001>

<llo_original>
// kernel: tpu_custom_call.1
$region0: #{tpu_custom_call.1}
  #allocation0 [shape = 'u32[]', space=smem, size = 0x4, offset = 0x4, fixed_abs, tag = 'smem constant byte address 0x4 - core index']
  #allocation1 [shape = 'u32[144,128]{1,0:T(1,128)}', space=vmem, size = 0x12000, scoped, tag = 'internal scratch']
  #allocation2 [shape = 'f32[16,128]{1,0:T(8,128)}', space=vmem, size = 0x2000, scoped, tag = 'scratch operand']
  #allocation3 [shape = 'f32[16,1]{1,0:T(8,128)}', space=vmem, size = 0x2000, scoped, tag = 'scratch operand']
  #allocation4 [shape = 'f32[16,1]{1,0:T(8,128)}', space=vmem, size = 0x2000, scoped, tag = 'scratch operand']
  #allocation5 [shape = 'f32[16,1]{1,0:T(8,128)}', space=vmem, size = 0x2000, scoped, tag = 'scratch operand']
  %s0 = inlined_call_operand.vmem [shape: s32[128,1], index: 0, kind: input, shape index: {}]
  %s1 = inlined_call_operand.vmem [shape: s32[1,128], index: 1, kind: input, shape index: {}]
  %s2 = inlined_call_operand.vmem [shape: f32[128,1], index: 2, kind: input, shape index: {}]
  %s3 = inlined_call_operand.vmem [shape: f32[128,128], index: 3, kind: input, shape index: {}]
  %s4 = inlined_call_operand.vmem [shape: f32[128,128], index: 4, kind: input, shape index: {}]
  %s5 = inlined_call_operand.vmem [shape: f32[128,1], index: 5, kind: output, shape index: {}]
  %s6 = sld [smem:[#allocation0]]
  $region61: #{tpu_custom_call.1} parent=0
    _
  %s8 = ssub.s32 1, %s6
  %s9 = scalar_select 0, %s8, %s6
  loop: start=0, step=1, limit=10
  $region2: #{tpu_custom_call.1} parent=0 // loop_pre_header
    _
  $region3: #{tpu_custom_call.1} parent=0 // loop_header
    %s11 = sphi 0, %s15
    %p12 = scmp.ge.s32.totalorder %s11, 10
    %s18 = sphi 0, %s30
    %s19 = sphi 0, %s26
    %s20 = sphi 0, %s18
    %s21 = sphi 0, %s19
    %s22 = sphi 0, %s20
    %s23 = sphi 0, %s21
    %s33 = sphi 0, %s35
    %s36 = sphi 0, %s33
    %s37 = sphi 0, %s36
    %s53 = sphi 0, %s37
    %s59 = sphi 0, %s61
    %s62 = sphi 0, %s59
    %s63 = sphi 0, %s62
    %s79 = sphi 0, %s63
    %s85 = sphi 0, %s87
    %s88 = sphi 0, %s85
    %s89 = sphi 0, %s88
    %s105 = sphi 0, %s89
    %s111 = sphi 0, %s113
    %s114 = sphi 0, %s111
    %s115 = sphi 0, %s114
    %s131 = sphi 0, %s115
    %s137 = sphi 0, %s139
    %s140 = sphi 0, %s137
    %s141 = sphi 0, %s140
    %s157 = sphi 0, %s141
    %s163 = sphi 0, %s165
    %s166 = sphi 0, %s163
    %s167 = sphi 0, %s166
    %s183 = sphi 0, %s167
  $region4: #{tpu_custom_call.1} parent=0 // loop_header_branch
    %14 = sbr.rel (%p12) target = $region8
  $region5: #{tpu_custom_call.1} parent=0 // loop_body
    %s16 = ssub.s32 %s11, 1
    %s17 = ssub.s32 %s11, 2
    %s24 = sadd.s32 1, %s19
    %p25 = scmp.ge.s32.totalorder %s24, 1
    %s26 = scalar_select %p25, 0, %s24
    %s27 = sadd.s32 1, %s18
    %s28 = scalar_select %p25, %s27, %s18
    %p29 = scmp.ge.s32.totalorder %s28, 8
    %s30 = scalar_select %p29, 0, %s28
    %s31 = ssub.s32 %s18, %s30
    %p32 = scmp.eq.s32.totalorder %s31, 0
    %s34 = sadd.s32 %s33, 1
    %s35 = scalar_select %p32, %s33, %s34
    %p38 = pneg %p32
    %p39 = scmp.eq.s32.totalorder %s11, 7
    %p40 = por %p38, %p39
    %p41 = scmp.ne.s32.totalorder %s33, %s36
    %p42 = scmp.eq.s32.totalorder %s11, 0
    %p43 = por %p41, %p42
    %p44 = scmp.ne.s32.totalorder %s33, %s36
    %p45 = scmp.eq.s32.totalorder %s16, 7
    %p46 = por %p44, %p45
    %p47 = scmp.ne.s32.totalorder %s36, %s37
    %p48 = scmp.eq.s32.totalorder %s16, 0
    %p49 = por %p47, %p48
    %p50 = scmp.ne.s32.totalorder %s36, %s37
    %p51 = scmp.eq.s32.totalorder %s17, 7
    %p52 = por %p50, %p51
    %p54 = scmp.ne.s32.totalorder %s37, %s53
    %p55 = scmp.eq.s32.totalorder %s17, 0
    %p56 = por %p54, %p55
    %s57 = ssub.s32 %s19, %s26
    %p58 = scmp.eq.s32.totalorder %s57, 0
    %s60 = sadd.s32 %s59, 1
    %s61 = scalar_select %p58, %s59, %s60
    %p64 = pneg %p58
    %p65 = scmp.eq.s32.totalorder %s11, 7
    %p66 = por %p64, %p65
    %p67 = scmp.ne.s32.totalorder %s59, %s62
    %p68 = scmp.eq.s32.totalorder %s11, 0
    %p69 = por %p67, %p68
    %p70 = scmp.ne.s32.totalorder %s59, %s62
    %p71 = scmp.eq.s32.totalorder %s16, 7
    %p72 = por %p70, %p71
    %p73 = scmp.ne.s32.totalorder %s62, %s63
    %p74 = scmp.eq.s32.totalorder %s16, 0
    %p75 = por %p73, %p74
    %p76 = scmp.ne.s32.totalorder %s62, %s63
    %p77 = scmp.eq.s32.totalorder %s17, 7
    %p78 = por %p76, %p77
    %p80 = scmp.ne.s32.totalorder %s63, %s79
    %p81 = scmp.eq.s32.totalorder %s17, 0
    %p82 = por %p80, %p81
    %s83 = ssub.s32 %s18, %s30
    %p84 = scmp.eq.s32.totalorder %s83, 0
    %s86 = sadd.s32 %s85, 1
    %s87 = scalar_select %p84, %s85, %s86
    %p90 = pneg %p84
    %p91 = scmp.eq.s32.totalorder %s11, 7
    %p92 = por %p90, %p91
    %p93 = scmp.ne.s32.totalorder %s85, %s88
    %p94 = scmp.eq.s32.totalorder %s11, 0
    %p95 = por %p93, %p94
    %p96 = scmp.ne.s32.totalorder %s85, %s88
    %p97 = scmp.eq.s32.totalorder %s16, 7
    %p98 = por %p96, %p97
    %p99 = scmp.ne.s32.totalorder %s88, %s89
    %p100 = scmp.eq.s32.totalorder %s16, 0
    %p101 = por %p99, %p100
    %p102 = scmp.ne.s32.totalorder %s88, %s89
    %p103 = scmp.eq.s32.totalorder %s17, 7
    %p104 = por %p102, %p103
    %p106 = scmp.ne.s32.totalorder %s89, %s105
    %p107 = scmp.eq.s32.totalorder %s17, 0
    %p108 = por %p106, %p107
    %s109 = ssub.s32 %s18, %s30
    %p110 = scmp.eq.s32.totalorder %s109, 0
    %s112 = sadd.s32 %s111, 1
    %s113 = scalar_select %p110, %s111, %s112
    %p116 = pneg %p110
    %p117 = scmp.eq.s32.totalorder %s11, 7
    %p118 = por %p116, %p117
    %p119 = scmp.ne.s32.totalorder %s111, %s114
    %p120 = scmp.eq.s32.totalorder %s11, 0
    %p121 = por %p119, %p120
    %p122 = scmp.ne.s32.totalorder %s111, %s114
    %p123 = scmp.eq.s32.totalorder %s16, 7
    %p124 = por %p122, %p123
    %p125 = scmp.ne.s32.totalorder %s114, %s115
    %p126 = scmp.eq.s32.totalorder %s16, 0
    %p127 = por %p125, %p126
    %p128 = scmp.ne.s32.totalorder %s114, %s115
    %p129 = scmp.eq.s32.totalorder %s17, 7
    %p130 = por %p128, %p129
    %p132 = scmp.ne.s32.totalorder %s115, %s131
    %p133 = scmp.eq.s32.totalorder %s17, 0
    %p134 = por %p132, %p133
    %s135 = ssub.s32 %s19, %s26
    %p136 = scmp.eq.s32.totalorder %s135, 0
    %s138 = sadd.s32 %s137, 1
    %s139 = scalar_select %p136, %s137, %s138
    %p142 = pneg %p136
    %p143 = scmp.eq.s32.totalorder %s11, 7
    %p144 = por %p142, %p143
    %p145 = scmp.ne.s32.totalorder %s137, %s140
    %p146 = scmp.eq.s32.totalorder %s11, 0
    %p147 = por %p145, %p146
    %p148 = scmp.ne.s32.totalorder %s137, %s140
    %p149 = scmp.eq.s32.totalorder %s16, 7
    %p150 = por %p148, %p149
    %p151 = scmp.ne.s32.totalorder %s140, %s141
    %p152 = scmp.eq.s32.totalorder %s16, 0
    %p153 = por %p151, %p152
    %p154 = scmp.ne.s32.totalorder %s140, %s141
    %p155 = scmp.eq.s32.totalorder %s17, 7
    %p156 = por %p154, %p155
    %p158 = scmp.ne.s32.totalorder %s141, %s157
    %p159 = scmp.eq.s32.totalorder %s17, 0
    %p160 = por %p158, %p159
    %s161 = ssub.s32 %s18, %s30
    %p162 = scmp.eq.s32.totalorder %s161, 0
    %s164 = sadd.s32 %s163, 1
    %s165 = scalar_select %p162, %s163, %s164
    %p168 = pneg %p162
    %p169 = scmp.eq.s32.totalorder %s11, 7
    %p170 = por %p168, %p169
    %p171 = scmp.ne.s32.totalorder %s163, %s166
    %p172 = scmp.eq.s32.totalorder %s11, 0
    %p173 = por %p171, %p172
    %p174 = scmp.ne.s32.totalorder %s163, %s166
    %p175 = scmp.eq.s32.totalorder %s16, 7
    %p176 = por %p174, %p175
    %p177 = scmp.ne.s32.totalorder %s166, %s167
    %p178 = scmp.eq.s32.totalorder %s16, 0
    %p179 = por %p177, %p178
    %p180 = scmp.ne.s32.totalorder %s166, %s167
    %p181 = scmp.eq.s32.totalorder %s17, 7
    %p182 = por %p180, %p181
    %p184 = scmp.ne.s32.totalorder %s167, %s183
    %p185 = scmp.eq.s32.totalorder %s17, 0
    %p186 = por %p184, %p185
    %p187 = scmp.le.s32.totalorder 1, %s11
    %p188 = scmp.lt.s32.totalorder %s11, 9
    %p189 = pnand %p187, %p188
    %p190 = pneg %p189
    // Predicated region
    $region9: #{tpu_custom_call.1} parent=5 // pred_check
      _
    $region10: #{tpu_custom_call.1} parent=5 // pred_check_branch
      %192 = sbr.rel (%p189) target = $region12
    $region11: #{tpu_custom_call.1} parent=5 // pred_region
      %s193 = ssub.s32 %s11, 1
      // Predicated region
      $region13: #{tpu_custom_call.1} parent=11 // pred_check
        %p194 = pneg %p75
      $region14: #{tpu_custom_call.1} parent=11 // pred_check_branch
        %196 = sbr.rel (%p194) target = $region16
      $region15: #{tpu_custom_call.1} parent=11 // pred_region
        %p197 = scmp.lt.s32.totalorder %s21, 0
        %s198 = scalar_select %p197, %s21, 0
        %s199 = scalar_lea.vmem %s1, %s198
      $region16: #{tpu_custom_call.1} parent=11 // pred_fallthru
        _
      // Predicated region
      $region17: #{tpu_custom_call.1} parent=11 // pred_check
        %p200 = pneg %p153
      $region18: #{tpu_custom_call.1} parent=11 // pred_check_branch
        %202 = sbr.rel (%p200) target = $region20
      $region19: #{tpu_custom_call.1} parent=11 // pred_region
        %p203 = scmp.lt.s32.totalorder %s21, 0
        %s204 = scalar_select %p203, %s21, 0
        %s205 = smul.addr %s204, 8
        %s206 = scalar_lea.vmem %s4, %s205
      $region20: #{tpu_custom_call.1} parent=11 // pred_fallthru
        _
    $region12: #{tpu_custom_call.1} parent=5 // pred_fallthru
      _
    %p207 = scmp.lt.s32.totalorder %s11, 8
    // Predicated region
    $region21: #{tpu_custom_call.1} parent=5 // pred_check
      %p208 = pneg %p207
    $region22: #{tpu_custom_call.1} parent=5 // pred_check_branch
      %210 = sbr.rel (%p208) target = $region24
    $region23: #{tpu_custom_call.1} parent=5 // pred_region
      // Predicated region
      $region25: #{tpu_custom_call.1} parent=23 // pred_check
        %p211 = pneg %p43
      $region26: #{tpu_custom_call.1} parent=23 // pred_check_branch
        %213 = sbr.rel (%p211) target = $region28
      $region27: #{tpu_custom_call.1} parent=23 // pred_region
        %s214 = smul.u32 2, %s18
        %p215 = scmp.lt.s32.totalorder %s214, 15
        %s216 = scalar_select %p215, %s214, 15
        %s217 = smul.addr %s216, 8
        %s218 = scalar_lea.vmem %s0, %s217
        %s219 = smul.u32 2, %s18
      $region28: #{tpu_custom_call.1} parent=23 // pred_fallthru
        _
      // Predicated region
      $region29: #{tpu_custom_call.1} parent=23 // pred_check
        %p220 = pneg %p95
      $region30: #{tpu_custom_call.1} parent=23 // pred_check_branch
        %222 = sbr.rel (%p220) target = $region32
      $region31: #{tpu_custom_call.1} parent=23 // pred_region
        %s223 = smul.u32 2, %s18
        %p224 = scmp.lt.s32.totalorder %s223, 15
        %s225 = scalar_select %p224, %s223, 15
        %s226 = smul.addr %s225, 8
        %s227 = scalar_lea.vmem %s2, %s226
        %s228 = smul.u32 2, %s18
      $region32: #{tpu_custom_call.1} parent=23 // pred_fallthru
        _
      // Predicated region
      $region33: #{tpu_custom_call.1} parent=23 // pred_check
        %p229 = pneg %p121
      $region34: #{tpu_custom_call.1} parent=23 // pred_check_branch
        %231 = sbr.rel (%p229) target = $region36
      $region35: #{tpu_custom_call.1} parent=23 // pred_region
        %s232 = smul.u32 2, %s18
        %p233 = scmp.lt.s32.totalorder %s232, 15
        %s234 = scalar_select %p233, %s232, 15
        %s235 = smul.addr %s234, 8
        %s236 = scalar_lea.vmem %s3, %s235
        %s237 = smul.u32 2, %s18
      $region36: #{tpu_custom_call.1} parent=23 // pred_fallthru
        _
    $region24: #{tpu_custom_call.1} parent=5 // pred_fallthru
      _
    %p238 = scmp.le.s32.totalorder 1, %s11
    %p239 = scmp.lt.s32.totalorder %s11, 9
    %p240 = pnand %p238, %p239
    %p241 = pneg %p240
    // Predicated region
    $region37: #{tpu_custom_call.1} parent=5 // pred_check
      _
    $region38: #{tpu_custom_call.1} parent=5 // pred_check_branch
      %243 = sbr.rel (%p240) target = $region40
    $region39: #{tpu_custom_call.1} parent=5 // pred_region
      %s244 = ssub.s32 %s11, 1
      %s245 = smul.u32 2, %s20
      %p246 = scmp.lt.s32.totalorder %s245, 15
      %s247 = scalar_select %p246, %s245, 15
      %s248 = smul.addr %s247, 8
      %s249 = scalar_lea.vmem %s0, %s248
      %p250 = pneg %p49
      %p251 = pneg %p46
      %p252 = scmp.lt.s32.totalorder %s21, 0
      %s253 = scalar_select %p252, %s21, 0
      %s254 = scalar_lea.vmem %s1, %s253
      %p255 = pneg %p75
      %p256 = pneg %p72
      %s257 = smul.u32 2, %s20
      %p258 = scmp.lt.s32.totalorder %s257, 15
      %s259 = scalar_select %p258, %s257, 15
      %s260 = smul.addr %s259, 8
      %s261 = scalar_lea.vmem %s2, %s260
      %p262 = pneg %p101
      %p263 = pneg %p98
      %s264 = smul.u32 2, %s20
      %p265 = scmp.lt.s32.totalorder %s264, 15
      %s266 = scalar_select %p265, %s264, 15
      %s267 = smul.addr %s266, 8
      %s268 = scalar_lea.vmem %s3, %s267
      %p269 = pneg %p127
      %p270 = pneg %p124
      %p271 = scmp.lt.s32.totalorder %s21, 0
      %s272 = scalar_select %p271, %s21, 0
      %s273 = smul.addr %s272, 8
      %s274 = scalar_lea.vmem %s4, %s273
      %p275 = pneg %p153
      %p276 = pneg %p150
      %p277 = pneg %p179
      %p278 = pneg %p176
      %s279 = smul.u32 2, %s20
      %p280 = scmp.lt.s32.totalorder %s279, 15
      %s281 = scalar_select %p280, %s279, 15
      %s282 = smul.addr %s281, 8
      %s283 = scalar_lea.vmem %s5, %s282
      %s284 = smul.u32 2, %s20
      %p285 = scmp.lt.s32.totalorder %s284, 15
      %s286 = scalar_select %p285, %s284, 15
      %s287 = smul.addr %s286, 8
      %s288 = scalar_lea.vmem %s0, %s287
      %s289 = smul.u32 2, %s20
      %p290 = scmp.lt.s32.totalorder %s21, 0
      %s291 = scalar_select %p290, %s21, 0
      %s292 = scalar_lea.vmem %s1, %s291
      %s293 = smul.u32 2, %s20
      %p294 = scmp.lt.s32.totalorder %s293, 15
      %s295 = scalar_select %p294, %s293, 15
      %s296 = smul.addr %s295, 8
      %s297 = scalar_lea.vmem %s2, %s296
      %s298 = smul.u32 2, %s20
      %s299 = smul.u32 2, %s20
      %p300 = scmp.lt.s32.totalorder %s299, 15
      %s301 = scalar_select %p300, %s299, 15
      %s302 = smul.addr %s301, 8
      %s303 = scalar_lea.vmem %s3, %s302
      %s304 = smul.u32 2, %s20
      %p305 = scmp.lt.s32.totalorder %s21, 0
      %s306 = scalar_select %p305, %s21, 0
      %s307 = smul.addr %s306, 8
      %s308 = scalar_lea.vmem %s4, %s307
      %s309 = smul.u32 2, %s20
      %p310 = scmp.lt.s32.totalorder %s309, 15
      %s311 = scalar_select %p310, %s309, 15
      %s312 = smul.addr %s311, 8
      %s313 = scalar_lea.vmem %s5, %s312
      %s314 = smul.u32 2, %s20
      %p315 = scmp.eq.s32.totalorder %s21, 0
      // Predicated region
      $region41: #{tpu_custom_call.1} parent=39 // pred_check
        %p316 = pneg %p315
      $region42: #{tpu_custom_call.1} parent=39 // pred_check_branch
        %318 = sbr.rel (%p316) target = $region44
      $region43: #{tpu_custom_call.1} parent=39 // pred_region
        %vm319 = vcmask 7168
        %320 = vst.msk [vmem:[#allocation3] sm:$0xff] %vm319, -1e+30
        %321 = vst.msk [vmem:[#allocation3 + $0x8] sm:$0xff] %vm319, -1e+30
        %322 = vst.msk [vmem:[#allocation4] sm:$0xff] %vm319, 0.0
        %323 = vst.msk [vmem:[#allocation4 + $0x8] sm:$0xff] %vm319, 0.0
        %324 = vst.msk [vmem:[#allocation5] sm:$0xff] %vm319, 0.0
        %325 = vst.msk [vmem:[#allocation5 + $0x8] sm:$0xff] %vm319, 0.0
        %v326 = vld [vmem:[%s303] sm:$0xff]
        %v327 = vld [vmem:[%s303 + $0x8] sm:$0xff]
        %v328 = vmul.f32 %v326, 14.285714
        %v329 = vmul.f32 %v327, 14.285714
        %330 = vst [vmem:[#allocation2] sm:$0xff] %v328
        %331 = vst [vmem:[#allocation2 + $0x8] sm:$0xff] %v329
      $region44: #{tpu_custom_call.1} parent=39 // pred_fallthru
        _
      %v332 = vld [vmem:[#allocation2] sm:$0xff]
      %v333 = vld [vmem:[#allocation2 + $0x8] sm:$0xff]
      %v334 = vld [vmem:[%s308] sm:$0xff]
      %v335 = vld [vmem:[%s308 + $0x8] sm:$0xff]
      %v336 = vld [vmem:[%s308 + $0x10] sm:$0xff]
      %v337 = vld [vmem:[%s308 + $0x18] sm:$0xff]
      %v338 = vld [vmem:[%s308 + $0x20] sm:$0xff]
      %v339 = vld [vmem:[%s308 + $0x28] sm:$0xff]
      %v340 = vld [vmem:[%s308 + $0x30] sm:$0xff]
      %v341 = vld [vmem:[%s308 + $0x38] sm:$0xff]
      %v342 = vld [vmem:[%s308 + $0x40] sm:$0xff]
      %v343 = vld [vmem:[%s308 + $0x48] sm:$0xff]
      %v344 = vld [vmem:[%s308 + $0x50] sm:$0xff]
      %v345 = vld [vmem:[%s308 + $0x58] sm:$0xff]
      %v346 = vld [vmem:[%s308 + $0x60] sm:$0xff]
      %v347 = vld [vmem:[%s308 + $0x68] sm:$0xff]
      %v348 = vld [vmem:[%s308 + $0x70] sm:$0xff]
      %v349 = vld [vmem:[%s308 + $0x78] sm:$0xff]
      %350 = vmatprep.subr.mxu0 0.0
      %351 = vmatpush1.msra.mxu0 %v349
      %352 = vmatprep.subr.mxu0 0.0
      %353 = vmatpush1.msra.mxu0 %v348
      %354 = vmatprep.subr.mxu0 0.0
      %355 = vmatpush1.msra.mxu0 %v347
      %356 = vmatprep.subr.mxu0 0.0
      %357 = vmatpush1.msra.mxu0 %v346
      %358 = vmatprep.subr.mxu0 0.0
      %359 = vmatpush1.msra.mxu0 %v345
      %360 = vmatprep.subr.mxu0 0.0
      %361 = vmatpush1.msra.mxu0 %v344
      %362 = vmatprep.subr.mxu0 0.0
      %363 = vmatpush1.msra.mxu0 %v343
      %364 = vmatprep.subr.mxu0 0.0
      %365 = vmatpush1.msra.mxu0 %v342
      %366 = vmatprep.subr.mxu0 0.0
      %367 = vmatpush1.msra.mxu0 %v341
      %368 = vmatprep.subr.mxu0 0.0
      %369 = vmatpush1.msra.mxu0 %v340
      %370 = vmatprep.subr.mxu0 0.0
      %371 = vmatpush1.msra.mxu0 %v339
      %372 = vmatprep.subr.mxu0 0.0
      %373 = vmatpush1.msra.mxu0 %v338
      %374 = vmatprep.subr.mxu0 0.0
      %375 = vmatpush1.msra.mxu0 %v337
      %376 = vmatprep.subr.mxu0 0.0
      %377 = vmatpush1.msra.mxu0 %v336
      %378 = vmatprep.subr.mxu0 0.0
      %379 = vmatpush1.msra.mxu0 %v335
      %380 = vmatprep.subr.mxu0 0.0
      %381 = vmatpush1.msra.mxu0 %v334
      %382 = vmatprep.subr.mxu0 0.0
      %383 = vmatpush2.msra.mxu0 0.0
      %384 = vmatprep.subr.mxu0 0.0
      %385 = vmatpush2.msra.mxu0 0.0
      %386 = vmatprep.subr.mxu0 0.0
      %387 = vmatpush2.msra.mxu0 0.0
      %388 = vmatprep.subr.mxu0 0.0
      %389 = vmatpush2.msra.mxu0 0.0
      %390 = vmatprep.subr.mxu0 0.0
      %391 = vmatpush2.msra.mxu0 0.0
      %392 = vmatprep.subr.mxu0 0.0
      %393 = vmatpush2.msra.mxu0 0.0
      %394 = vmatprep.subr.mxu0 0.0
      %395 = vmatpush2.msra.mxu0 0.0
      %396 = vmatprep.subr.mxu0 0.0
      %397 = vmatpush2.msra.mxu0 0.0
      %398 = vmatprep.subr.mxu0 0.0
      %399 = vmatpush2.msra.mxu0 0.0
      %400 = vmatprep.subr.mxu0 0.0
      %401 = vmatpush2.msra.mxu0 0.0
      %402 = vmatprep.subr.mxu0 0.0
      %403 = vmatpush2.msra.mxu0 0.0
      %404 = vmatprep.subr.mxu0 0.0
      %405 = vmatpush2.msra.mxu0 0.0
      %406 = vmatprep.subr.mxu0 0.0
      %407 = vmatpush2.msra.mxu0 0.0
      %408 = vmatprep.subr.mxu0 0.0
      %409 = vmatpush2.msra.mxu0 0.0
      %410 = vmatprep.subr.mxu0 0.0
      %411 = vmatpush2.msra.mxu0 0.0
      %412 = vmatprep.subr.mxu0 0.0
      %413 = vmatpush2.msra.mxu0 0.0
      %414 = vmatprep.mubr.f32.mxu0 0.0
      %415 = vmatmul.mubr.f32.gmra.mxu0 %v332
      %v416 = vpop.f32.mrf.mxu0
      %v417 = vadd.f32 0.0, %v416
      %v418 = vpop.f32.mrf.mxu0
      %419 = vmatprep.mubr.f32.mxu0 0.0
      %420 = vmatmul.mubr.f32.gmra.mxu0 %v333
      %v421 = vpop.f32.mrf.mxu0
      %v422 = vadd.f32 0.0, %v421
      %v423 = vpop.f32.mrf.mxu0
      %424 = vdwg.mxu0
      %s425 = smul.u32 %s20, 16
      %v426 = vlaneseq
      %v427 = vshrl.u32 %v426, 7
      %v428 = vadd.s32 %v427, 8
      %v429 = vstv %s425
      %v430 = vadd.s32 %v429, %v427
      %v431 = vadd.s32 %v429, %v428
      %s432 = smul.u32 %s21, 128
      %v433 = vlaneseq
      %v434 = vand.u32 %v433, 127
      %v435 = vstv %s432
      %v436 = vadd.s32 %v435, %v434
      %vm437 = vcmp.ne.s32.totalorder %v430, %v436
      %vm438 = vcmp.ne.s32.totalorder %v431, %v436
      %vm439 = vcmp.lt.s32.totalorder %v436, 16
      %v440 = vsel %vm439, 1, 0
      %vm441 = vcmp.eq.s32.totalorder %v440, 1
      %vm442 = vmand %vm437, %vm441
      %vm443 = vmand %vm438, %vm441
      %v444 = vld [vmem:[%s288] sm:$0xff]
      %v445 = vld [vmem:[%s288 + $0x8] sm:$0xff]
      %v446 = vld [vmem:[%s292] sm:$0x1]
      %447 = vset.pattern.permute.xlu0 0
      %448 = vperm.xlu0 %447, %v444
      %v449 = vpop.permute.xlu0 %448
      %450 = vset.pattern.permute.xlu0 0
      %451 = vperm.xlu0 %450, %v445
      %v452 = vpop.permute.xlu0 %451
      %v453 = vlaneseq
      %v454 = vshrl.u32 %v453, 7
      %v455 = vsub.s32 0, %v454
      %v456 = vrot.slane %v446, %v455
      %vm457 = vcmp.eq.s32.totalorder %v449, %v456
      %vm458 = vcmp.eq.s32.totalorder %v452, %v456
      %vm459 = vmand %vm457, %vm442
      %vm460 = vmand %vm458, %vm443
      %v461 = vsel %vm442, %v417, -inf
      %v462 = vsel %vm443, %v422, -inf
      %463 = vmax.xlane.f32.xlu0 %v461
      %v464 = vpop.xlane.xlu0 %463
      %465 = vmax.xlane.f32.xlu0 %v462
      %v466 = vpop.xlane.xlu0 %465
      %v467 = vld [vmem:[#allocation3] sm:$0xff]
      %v468 = vld [vmem:[#allocation3 + $0x8] sm:$0xff]
      %v469 = vmax.f32 %v467, %v464
      %v470 = vmax.f32 %v468, %v466
      %v471 = vsub.f32 %v467, %v469
      %v472 = vsub.f32 %v468, %v470
      %v473 = vmul.f32 %v471, 1.442695
      %v474 = vpow.pop %v473
      %v475 = vmul.f32 %v472, 1.442695
      %v476 = vpow.pop %v475
      %vm477 = vcmask 7168
      %478 = vst.msk [vmem:[#allocation3] sm:$0xff] %vm477, %v469
      %479 = vst.msk [vmem:[#allocation3 + $0x8] sm:$0xff] %vm477, %v470
      %481 = vset.pattern.permute.xlu0 0
      %482 = vperm.xlu0 %481, %v469
      %v483 = vpop.permute.xlu0 %482
      %486 = vset.pattern.permute.xlu0 0
      %487 = vperm.xlu0 %486, %v470
      %v488 = vpop.permute.xlu0 %487
      %v490 = vsub.f32 %v417, %v483
      %v491 = vsub.f32 %v422, %v488
      %v492 = vmul.f32 %v490, 1.442695
      %v493 = vpow.pop %v492
      %v494 = vmul.f32 %v491, 1.442695
      %v495 = vpow.pop %v494
      %v496 = vsel %vm442, %v493, 0.0
      %v497 = vsel %vm443, %v495, 0.0
      %498 = vadd.xlane.f32.xlu0 %v496
      %v499 = vpop.xlane.xlu0 %498
      %500 = vadd.xlane.f32.xlu0 %v497
      %v501 = vpop.xlane.xlu0 %500
      %v502 = vld [vmem:[#allocation4] sm:$0xff]
      %v503 = vld [vmem:[#allocation4 + $0x8] sm:$0xff]
      %v504 = vmul.f32 %v474, %v502
      %v505 = vmul.f32 %v476, %v503
      %v506 = vadd.f32 %v504, %v499
      %v507 = vadd.f32 %v505, %v501
      %508 = vst.msk [vmem:[#allocation4] sm:$0xff] %vm477, %v506
      %509 = vst.msk [vmem:[#allocation4 + $0x8] sm:$0xff] %vm477, %v507
      %v510 = vld [vmem:[#allocation5] sm:$0xff]
      %v511 = vld [vmem:[#allocation5 + $0x8] sm:$0xff]
      %v512 = vsel %vm459, %v417, 0.0
      %v513 = vsel %vm460, %v422, 0.0
      %514 = vadd.xlane.f32.xlu0 %v512
      %v515 = vpop.xlane.xlu0 %514
      %516 = vadd.xlane.f32.xlu0 %v513
      %v517 = vpop.xlane.xlu0 %516
      %v518 = vadd.f32 %v510, %v515
      %v519 = vadd.f32 %v511, %v517
      %520 = vst.msk [vmem:[#allocation5] sm:$0xff] %vm477, %v518
      %521 = vst.msk [vmem:[#allocation5 + $0x8] sm:$0xff] %vm477, %v519
      // Predicated region
      $region45: #{tpu_custom_call.1} parent=39 // pred_check
        %p522 = pneg %p315
      $region46: #{tpu_custom_call.1} parent=39 // pred_check_branch
        %524 = sbr.rel (%p522) target = $region48
      $region47: #{tpu_custom_call.1} parent=39 // pred_region
        %v525 = vld [vmem:[%s297] sm:$0xff]
        %v526 = vld [vmem:[%s297 + $0x8] sm:$0xff]
        %v527 = vld [vmem:[#allocation3] sm:$0xff]
        %v528 = vld [vmem:[#allocation3 + $0x8] sm:$0xff]
        %v529 = vld [vmem:[#allocation4] sm:$0xff]
        %v530 = vld [vmem:[#allocation4 + $0x8] sm:$0xff]
        %v531 = vlog2.pop %v529
        %v532 = vmul.f32 %v531, 0.6931472
        %v533 = vlog2.pop %v530
        %v534 = vmul.f32 %v533, 0.6931472
        %v535 = vadd.f32 %v527, %v532
        %v536 = vadd.f32 %v528, %v534
        %v537 = vld [vmem:[#allocation5] sm:$0xff]
        %v538 = vld [vmem:[#allocation5 + $0x8] sm:$0xff]
        %v539 = vmax.f32 %v525, 1.0
        %v540 = vmax.f32 %v526, 1.0
        %v541 = vrcp.pop %v539
        %v542 = vmul.f32 %v537, %v541
        %v543 = vrcp.pop %v540
        %v544 = vmul.f32 %v538, %v543
        %v545 = vsub.f32 %v542, %v535
        %v546 = vsub.f32 %v544, %v536
        %vm547 = vcmp.gt.f32.partialorder %v525, 0.0
        %vm548 = vcmp.gt.f32.partialorder %v526, 0.0
        %v549 = vmul.f32 %v545, -1.0
        %v550 = vmul.f32 %v546, -1.0
        %v551 = vsel %vm547, %v549, 0.0
        %v552 = vsel %vm548, %v550, 0.0
        %553 = vst.msk [vmem:[%s313] sm:$0xff] %vm477, %v551
        %554 = vst.msk [vmem:[%s313 + $0x8] sm:$0xff] %vm477, %v552
      $region48: #{tpu_custom_call.1} parent=39 // pred_fallthru
        _
      %s555 = smul.u32 2, %s20
      %p556 = scmp.lt.s32.totalorder %s555, 15
      %s557 = scalar_select %p556, %s555, 15
      %s558 = smul.addr %s557, 8
      %s559 = scalar_lea.vmem %s5, %s558
      // Predicated region
      $region49: #{tpu_custom_call.1} parent=39 // pred_check
        %p560 = pneg %p176
      $region50: #{tpu_custom_call.1} parent=39 // pred_check_branch
        %562 = sbr.rel (%p560) target = $region52
      $region51: #{tpu_custom_call.1} parent=39 // pred_region
        %s563 = smul.u32 2, %s20
      $region52: #{tpu_custom_call.1} parent=39 // pred_fallthru
        _
    $region40: #{tpu_custom_call.1} parent=5 // pred_fallthru
      _
    %p564 = scmp.le.s32.totalorder 2, %s11
    // Predicated region
    $region53: #{tpu_custom_call.1} parent=5 // pred_check
      %p565 = pneg %p564
    $region54: #{tpu_custom_call.1} parent=5 // pred_check_branch
      %567 = sbr.rel (%p565) target = $region56
    $region55: #{tpu_custom_call.1} parent=5 // pred_region
      %s568 = ssub.s32 %s11, 2
      // Predicated region
      $region57: #{tpu_custom_call.1} parent=55 // pred_check
        %p569 = pneg %p182
      $region58: #{tpu_custom_call.1} parent=55 // pred_check_branch
        %571 = sbr.rel (%p569) target = $region60
      $region59: #{tpu_custom_call.1} parent=55 // pred_region
        %s572 = smul.u32 2, %s22
        %p573 = scmp.lt.s32.totalorder %s572, 15
        %s574 = scalar_select %p573, %s572, 15
        %s575 = smul.addr %s574, 8
        %s576 = scalar_lea.vmem %s5, %s575
      $region60: #{tpu_custom_call.1} parent=55 // pred_fallthru
        _
    $region56: #{tpu_custom_call.1} parent=5 // pred_fallthru
      _
  $region6: #{tpu_custom_call.1} parent=0 // loop_footer
    %s15 = sadd.s32 1, %s11
  $region7: #{tpu_custom_call.1} parent=0 // loop_footer_branch
    %10 = sbr.rel target = $region3
  $region8: #{tpu_custom_call.1} parent=0 // loop_exit
    _

</llo_original>
